<compile_context>
chip_gen: v7x
topology: tpu7x:2x2x1
jax: 0.10.0
libtpu: 0.0.40
codegen_flags: <defaults>
</compile_context>

<pallas_src>
import functools

import jax
import jax.numpy as jnp
import numpy as np
from jax.experimental import pallas as pl
from jax.experimental.pallas import tpu as pltpu

STATE_DIM = 8      # small, consistent with a low-dim RL state
ACTION_DIM = 4
H1, H2 = 400, 300

# Lane-aligned (multiple-of-128) padded hidden dims.  Zero padding keeps the math exact.
# Layer-3 matmul is computed to ACT_PAD lanes (MXU-friendly), but only the first
# ACTION_DIM columns are stored.
H1_PAD, H2_PAD, ACT_PAD = 512, 384, 128


def _round_up(x, m):
    return (x + m - 1) // m * m


def actor_kernel(x_ref, w1_ref, b1_ref, w2_ref, b2_ref, w3_ref, b3_ref, o_ref):
    """Fused 3-layer MLP on one batch tile. Weights stay resident across grid steps."""
    x = x_ref[...]  # [TB, STATE_DIM] f32

    # Layer 1: Linear(state_dim -> 512) + ReLU, kept fully in f32 (input precision;
    # only ~1% of total FLOPs so the f32 MXU passes are negligible).
    h1 = jnp.dot(x, w1_ref[...], preferred_element_type=jnp.float32)
    h1 = jnp.maximum(h1 + b1_ref[...], 0.0)

    # Layer 2: Linear(512 -> 384) + ReLU.  bf16 MXU operands, f32 accumulate.
    h2 = jnp.dot(h1.astype(w2_ref.dtype), w2_ref[...],
                 preferred_element_type=jnp.float32)
    h2 = jnp.maximum(h2 + b2_ref[...], 0.0)

    # Layer 3: lane-dense matmul to ACT_PAD, then 4-wide epilogue + unpadded store.
    out = jnp.dot(h2.astype(w3_ref.dtype), w3_ref[...],
                  preferred_element_type=jnp.float32)
    o_ref[...] = jnp.tanh(out[:, :ACTION_DIM] + b3_ref[...]).astype(o_ref.dtype)


@functools.partial(jax.jit, static_argnames=("block_b",))
def actor_forward(state, padded_params, *, block_b=256):
    """state: [B, STATE_DIM] f32 -> action: [B, ACTION_DIM] f32."""
    w1, b1, w2, b2, w3, b3 = padded_params
    B = state.shape[0]

    # Adaptive batch tile: aim for >=2 grid steps at large B (v7x dual-TC sharding and
    # DMA/compute overlap) while bounding padding waste to at most TB-8 rows.
    n_tiles = max(1, -(-B // block_b))          # ceil(B / block_b)
    TB = _round_up(-(-B // n_tiles), 8)         # round_up(ceil(B / n_tiles), 8)
    B_pad = _round_up(B, TB)
    if B_pad != B:
        state = jnp.pad(state, ((0, B_pad - B), (0, 0)))
    grid = (B_pad // TB,)

    def weight_spec(shape):
        # Constant block index -> DMA'd once, VMEM-resident across grid steps.
        # Single-buffered: re-double-buffering an unchanging block only wastes VMEM.
        return pl.BlockSpec(shape, lambda i: (0, 0), pipeline_mode=pl.Buffered(1))

    flops = 2 * B_pad * (STATE_DIM * H1_PAD + H1_PAD * H2_PAD + H2_PAD * ACT_PAD)
    bytes_accessed = int(
        B_pad * STATE_DIM * 4
        + sum(int(np.prod(a.shape)) * a.dtype.itemsize for a in padded_params)
        + B_pad * ACTION_DIM * 4
    )

    out = pl.pallas_call(
        actor_kernel,
        out_shape=jax.ShapeDtypeStruct((B_pad, ACTION_DIM), jnp.float32),
        grid=grid,
        in_specs=[
            pl.BlockSpec((TB, STATE_DIM), lambda i: (i, 0)),   # x, tiled over batch
            weight_spec((STATE_DIM, H1_PAD)),                  # W1 (f32)
            weight_spec((1, H1_PAD)),                          # b1 (f32)
            weight_spec((H1_PAD, H2_PAD)),                     # W2 (bf16)
            weight_spec((1, H2_PAD)),                          # b2 (f32)
            weight_spec((H2_PAD, ACT_PAD)),                    # W3 (bf16)
            weight_spec((1, ACTION_DIM)),                      # b3 (f32, unpadded)
        ],
        out_specs=pl.BlockSpec((TB, ACTION_DIM), lambda i: (i, 0)),
        compiler_params=pltpu.CompilerParams(
            dimension_semantics=("parallel",),   # megacore: shard batch tiles on v7x
            vmem_limit_bytes=32 * 1024 * 1024,
        ),
        cost_estimate=pl.CostEstimate(
            flops=flops,
            transcendentals=B_pad * ACTION_DIM,  # tanh
            bytes_accessed=bytes_accessed,
        ),
    )(state, w1, b1, w2, b2, w3, b3)

    return out[:B]


def init_params(key):
    """PyTorch default Linear init: uniform(-1/sqrt(fan_in), 1/sqrt(fan_in)).
    Weights are stored [in, out] (transposed vs. torch) so the kernel does x @ W."""
    ks = jax.random.split(key, 6)

    def lin(kw, kb, fan_in, fan_out):
        bound = 1.0 / np.sqrt(fan_in)
        w = jax.random.uniform(kw, (fan_in, fan_out), jnp.float32, -bound, bound)
        b = jax.random.uniform(kb, (1, fan_out), jnp.float32, -bound, bound)
        return w, b

    w1, b1 = lin(ks[0], ks[1], STATE_DIM, H1)
    w2, b2 = lin(ks[2], ks[3], H1, H2)
    w3, b3 = lin(ks[4], ks[5], H2, ACTION_DIM)
    return (w1, b1, w2, b2, w3, b3)


def pad_params_for_kernel(params, weights_dtype=jnp.bfloat16):
    """Zero-pad hidden dims to lane-aligned sizes.  Layer 1 stays f32 (input precision);
    layers 2/3 weights -> bf16 MXU operands.  b3 is NOT lane-padded (4-wide output).
    # TODO(synk): optional int8 (v5e/v6e) / fp8-e4m3 (v7x) weight quantization for the
    # latency-bound tiny-batch path; kept bf16 here for accuracy."""
    w1, b1, w2, b2, w3, b3 = params

    def padw(w, rows, cols, dtype):
        w = jnp.pad(w, ((0, rows - w.shape[0]), (0, cols - w.shape[1])))
        return w.astype(dtype)

    def padb(b, cols):
        return jnp.pad(b, ((0, 0), (0, cols - b.shape[1]))).astype(jnp.float32)

    return (
        padw(w1, STATE_DIM, H1_PAD, jnp.float32), padb(b1, H1_PAD),
        padw(w2, H1_PAD, H2_PAD, weights_dtype),  padb(b2, H2_PAD),
        padw(w3, H2_PAD, ACT_PAD, weights_dtype), b3.astype(jnp.float32),
    )


def actor_reference_f32(state, params):
    """Pure-f32 reference with the original PyTorch-module semantics."""
    w1, b1, w2, b2, w3, b3 = params
    a = jnp.maximum(state @ w1 + b1, 0.0)
    a = jnp.maximum(a @ w2 + b2, 0.0)
    return jnp.tanh(a @ w3 + b3)


def actor_reference_mxu(state, padded_params):
    """Mirrors the kernel's numerics (f32 layer 1, bf16-operand / f32-acc layers 2-3)."""
    w1, b1, w2, b2, w3, b3 = padded_params
    a = jnp.maximum(jnp.dot(state, w1, preferred_element_type=jnp.float32) + b1, 0.0)
    a = jnp.maximum(jnp.dot(a.astype(w2.dtype), w2,
                            preferred_element_type=jnp.float32) + b2, 0.0)
    out = jnp.dot(a.astype(w3.dtype), w3, preferred_element_type=jnp.float32)
    return jnp.tanh(out[:, :ACTION_DIM] + b3)


if __name__ == "__main__":
    key = jax.random.PRNGKey(0)
    k_params, k_state = jax.random.split(key)

    params = init_params(k_params)
    padded_params = pad_params_for_kernel(params)

    # Small inference-style batch (B=2).
    state = jax.random.normal(k_state, (2, STATE_DIM), dtype=jnp.float32)
    out = actor_forward(state, padded_params)
    out = jax.block_until_ready(out)
    assert out.shape == (2, ACTION_DIM)

    # Check against a reference mirroring the kernel's mixed-precision numerics.
    ref_exact = actor_reference_mxu(state, padded_params)
    np.testing.assert_allclose(np.asarray(out), np.asarray(ref_exact),
                               rtol=1e-3, atol=1e-3)

    # Loose check against the original f32 module semantics (bf16 weight rounding).
    ref_f32 = actor_reference_f32(state, params)
    np.testing.assert_allclose(np.asarray(out), np.asarray(ref_f32),
                               rtol=3e-2, atol=3e-2)

    # Larger, awkward batch (B=300): exercises the adaptive tile, multi-step grid
    # (grid=(2,) with TB=152) and the batch-padding path.
    state_big = jax.random.normal(jax.random.PRNGKey(1), (300, STATE_DIM),
                                  dtype=jnp.float32)
    out_big = jax.block_until_ready(actor_forward(state_big, padded_params))
    assert out_big.shape == (300, ACTION_DIM)
    ref_big = actor_reference_mxu(state_big, padded_params)
    np.testing.assert_allclose(np.asarray(out_big), np.asarray(ref_big),
                               rtol=1e-3, atol=1e-3)

    print("KERNEL_OK")
</pallas_src>

<mosaic_0001>
module attributes {stable_mosaic.version = 11 : i64} {
  func.func @actor_kernel(%arg0: i32, %arg1: memref<8x8xf32, #tpu.memory_space<vmem>>, %arg2: memref<8x512xf32, #tpu.memory_space<vmem>>, %arg3: memref<1x512xf32, #tpu.memory_space<vmem>>, %arg4: memref<512x384xbf16, #tpu.memory_space<vmem>>, %arg5: memref<1x384xf32, #tpu.memory_space<vmem>>, %arg6: memref<384x128xbf16, #tpu.memory_space<vmem>>, %arg7: memref<1x4xf32, #tpu.memory_space<vmem>>, %arg8: memref<8x4xf32, #tpu.memory_space<vmem>>) attributes {dimension_semantics = [#tpu.dimension_semantics<parallel>], iteration_bounds = array<i64: 1>, scalar_prefetch = 0 : i64, scratch_operands = 0 : i64, tpu.core_type = #tpu.core_type<tc>, window_params = [{transform_indices = @transform_0, window_bounds = array<i64: 8, 8>}, {pipeline_mode = #tpu.pipeline_mode<synchronous>, transform_indices = @transform_1, window_bounds = array<i64: 8, 512>}, {pipeline_mode = #tpu.pipeline_mode<synchronous>, transform_indices = @transform_2, window_bounds = array<i64: 1, 512>}, {pipeline_mode = #tpu.pipeline_mode<synchronous>, transform_indices = @transform_3, window_bounds = array<i64: 512, 384>}, {pipeline_mode = #tpu.pipeline_mode<synchronous>, transform_indices = @transform_4, window_bounds = array<i64: 1, 384>}, {pipeline_mode = #tpu.pipeline_mode<synchronous>, transform_indices = @transform_5, window_bounds = array<i64: 384, 128>}, {pipeline_mode = #tpu.pipeline_mode<synchronous>, transform_indices = @transform_6, window_bounds = array<i64: 1, 4>}, {transform_indices = @transform_7, window_bounds = array<i64: 8, 4>}]} {
    %c0 = arith.constant 0 : index
    %c0_0 = arith.constant 0 : index
    %0 = vector.load %arg1[%c0, %c0_0] : memref<8x8xf32, #tpu.memory_space<vmem>>, vector<8x8xf32>
    %c0_1 = arith.constant 0 : index
    %c0_2 = arith.constant 0 : index
    %1 = vector.load %arg2[%c0_1, %c0_2] : memref<8x512xf32, #tpu.memory_space<vmem>>, vector<8x512xf32>
    %cst = arith.constant dense<0.000000e+00> : vector<8x512xf32>
    %2 = tpu.matmul %0, %1, %cst {dimension_numbers = #tpu.dot_dimension_numbers<[1], [0], [0], [1], [0, 0, 1, 1], [], []>} : vector<8x8xf32>, vector<8x512xf32>, vector<8x512xf32> -> vector<8x512xf32>
    %c0_3 = arith.constant 0 : index
    %c0_4 = arith.constant 0 : index
    %3 = vector.load %arg3[%c0_3, %c0_4] : memref<1x512xf32, #tpu.memory_space<vmem>>, vector<1x512xf32>
    %4 = vector.broadcast %3 : vector<1x512xf32> to vector<8x512xf32>
    %5 = arith.addf %2, %4 : vector<8x512xf32>
    %cst_5 = arith.constant 0.000000e+00 : f32
    %6 = vector.broadcast %cst_5 : f32 to vector<8x512xf32>
    %7 = arith.maximumf %5, %6 : vector<8x512xf32>
    %8 = arith.truncf %7 : vector<8x512xf32> to vector<8x512xbf16>
    %c0_6 = arith.constant 0 : index
    %c0_7 = arith.constant 0 : index
    %9 = vector.load %arg4[%c0_6, %c0_7] : memref<512x384xbf16, #tpu.memory_space<vmem>>, vector<512x384xbf16>
    %cst_8 = arith.constant dense<0.000000e+00> : vector<8x384xf32>
    %10 = tpu.matmul %8, %9, %cst_8 {dimension_numbers = #tpu.dot_dimension_numbers<[1], [0], [0], [1], [0, 0, 1, 1], [], []>} : vector<8x512xbf16>, vector<512x384xbf16>, vector<8x384xf32> -> vector<8x384xf32>
    %c0_9 = arith.constant 0 : index
    %c0_10 = arith.constant 0 : index
    %11 = vector.load %arg5[%c0_9, %c0_10] : memref<1x384xf32, #tpu.memory_space<vmem>>, vector<1x384xf32>
    %12 = vector.broadcast %11 : vector<1x384xf32> to vector<8x384xf32>
    %13 = arith.addf %10, %12 : vector<8x384xf32>
    %cst_11 = arith.constant 0.000000e+00 : f32
    %14 = vector.broadcast %cst_11 : f32 to vector<8x384xf32>
    %15 = arith.maximumf %13, %14 : vector<8x384xf32>
    %16 = arith.truncf %15 : vector<8x384xf32> to vector<8x384xbf16>
    %c0_12 = arith.constant 0 : index
    %c0_13 = arith.constant 0 : index
    %17 = vector.load %arg6[%c0_12, %c0_13] : memref<384x128xbf16, #tpu.memory_space<vmem>>, vector<384x128xbf16>
    %cst_14 = arith.constant dense<0.000000e+00> : vector<8x128xf32>
    %18 = tpu.matmul %16, %17, %cst_14 {dimension_numbers = #tpu.dot_dimension_numbers<[1], [0], [0], [1], [0, 0, 1, 1], [], []>} : vector<8x384xbf16>, vector<384x128xbf16>, vector<8x128xf32> -> vector<8x128xf32>
    %19 = vector.extract_strided_slice %18 {offsets = [0, 0], sizes = [8, 4], strides = [1, 1]} : vector<8x128xf32> to vector<8x4xf32>
    %c0_15 = arith.constant 0 : index
    %c0_16 = arith.constant 0 : index
    %20 = vector.load %arg7[%c0_15, %c0_16] : memref<1x4xf32, #tpu.memory_space<vmem>>, vector<1x4xf32>
    %21 = vector.broadcast %20 : vector<1x4xf32> to vector<8x4xf32>
    %22 = arith.addf %19, %21 : vector<8x4xf32>
    %23 = math.tanh %22 : vector<8x4xf32>
    %c0_17 = arith.constant 0 : index
    %c0_18 = arith.constant 0 : index
    %24 = vector.load %arg8[%c0_17, %c0_18] : memref<8x4xf32, #tpu.memory_space<vmem>>, vector<8x4xf32>
    tpu.vector_store %arg8[%c0_17, %c0_18], %23 {strides = array<i32>} : memref<8x4xf32, #tpu.memory_space<vmem>>, vector<8x4xf32>,
    return
  }
  func.func @transform_0(%arg0: i32) -> (i32, i32) {
    %c0_i32 = arith.constant 0 : i32
    %c0_i32_0 = arith.constant 0 : i32
    return %arg0, %c0_i32 : i32, i32
  }
  func.func @transform_1(%arg0: i32) -> (i32, i32) {
    %c0_i32 = arith.constant 0 : i32
    %c0_i32_0 = arith.constant 0 : i32
    %c0_i32_1 = arith.constant 0 : i32
    return %c0_i32, %c0_i32_0 : i32, i32
  }
  func.func @transform_2(%arg0: i32) -> (i32, i32) {
    %c0_i32 = arith.constant 0 : i32
    %c0_i32_0 = arith.constant 0 : i32
    %c0_i32_1 = arith.constant 0 : i32
    return %c0_i32, %c0_i32_0 : i32, i32
  }
  func.func @transform_3(%arg0: i32) -> (i32, i32) {
    %c0_i32 = arith.constant 0 : i32
    %c0_i32_0 = arith.constant 0 : i32
    %c0_i32_1 = arith.constant 0 : i32
    return %c0_i32, %c0_i32_0 : i32, i32
  }
  func.func @transform_4(%arg0: i32) -> (i32, i32) {
    %c0_i32 = arith.constant 0 : i32
    %c0_i32_0 = arith.constant 0 : i32
    %c0_i32_1 = arith.constant 0 : i32
    return %c0_i32, %c0_i32_0 : i32, i32
  }
  func.func @transform_5(%arg0: i32) -> (i32, i32) {
    %c0_i32 = arith.constant 0 : i32
    %c0_i32_0 = arith.constant 0 : i32
    %c0_i32_1 = arith.constant 0 : i32
    return %c0_i32, %c0_i32_0 : i32, i32
  }
  func.func @transform_6(%arg0: i32) -> (i32, i32) {
    %c0_i32 = arith.constant 0 : i32
    %c0_i32_0 = arith.constant 0 : i32
    %c0_i32_1 = arith.constant 0 : i32
    return %c0_i32, %c0_i32_0 : i32, i32
  }
  func.func @transform_7(%arg0: i32) -> (i32, i32) {
    %c0_i32 = arith.constant 0 : i32
    %c0_i32_0 = arith.constant 0 : i32
    return %arg0, %c0_i32 : i32, i32
  }
}

</mosaic_0001>

<llo_original>
// kernel: actor_forward.1
$region0: #{actor_forward.1}
  #allocation0 [shape = 'u32[]', space=smem, size = 0x4, offset = 0x4, fixed_abs, tag = 'smem constant byte address 0x4 - core index']
  #allocation1 [shape = 'u32[144,128]{1,0:T(1,128)}', space=vmem, size = 0x12000, scoped, tag = 'internal scratch']
  %s0 = inlined_call_operand.vmem [shape: f32[8,8], index: 0, kind: input, shape index: {}]
  %s1 = inlined_call_operand.hbm [shape: f32[8,512], index: 1, kind: input, shape index: {}]
  %s2 = inlined_call_operand.vmem [shape: f32[1,512], index: 2, kind: input, shape index: {}]
  %s3 = inlined_call_operand.hbm [shape: bf16[512,384], index: 3, kind: input, shape index: {}]
  %s4 = inlined_call_operand.vmem [shape: f32[1,384], index: 4, kind: input, shape index: {}]
  %s5 = inlined_call_operand.hbm [shape: bf16[384,128], index: 5, kind: input, shape index: {}]
  %s6 = inlined_call_operand.vmem [shape: f32[1,4], index: 6, kind: input, shape index: {}]
  %s7 = inlined_call_operand.vmem [shape: f32[8,4], index: 7, kind: output, shape index: {}]
  %s8 = sld [smem:[#allocation0]]
  $region50: #{actor_forward.1} parent=0
    _
  %s10 = ssub.s32 1, %s8
  %s11 = scalar_select 0, %s10, %s8
  $region1: #{actor_forward.1} parent=0
    #allocation2 [shape = 'u8[16384]{0}', space=vmem, size = 0x4000, scoped, tag = 'input window, operand 1, single buffered']
    #allocation3 [shape = 's32[1]{0}', space=sflag, size = 0x4, scoped, tag = 'scoped memory for actor_forward.1']
    #allocation4 [shape = 'u8[393216]{0}', space=vmem, size = 0x60000, scoped, tag = 'input window, operand 3, single buffered']
    #allocation5 [shape = 's32[1]{0}', space=sflag, size = 0x4, scoped, tag = 'scoped memory for actor_forward.1']
    #allocation6 [shape = 'u8[98304]{0}', space=vmem, size = 0x18000, scoped, tag = 'input window, operand 5, single buffered']
    %12 = vsyncpa [#allocation3], 0
    %13 = vsyncpa [#allocation5], 0
    // Predicated region
    $region2: #{actor_forward.1} parent=1 // pred_check
      _
    $region3: #{actor_forward.1} parent=1 // pred_check_branch
      %15 = sbr.rel (0) target = $region5
    $region4: #{actor_forward.1} parent=1 // pred_region
      _
    $region5: #{actor_forward.1} parent=1 // pred_fallthru
      _
    // Predicated region
    $region6: #{actor_forward.1} parent=1 // pred_check
      _
    $region7: #{actor_forward.1} parent=1 // pred_check_branch
      %17 = sbr.rel (0) target = $region9
    $region8: #{actor_forward.1} parent=1 // pred_region
      %s19 = ssub.s32 512, 512
      %20 = vsyncadd [#allocation3], %s19
      %s22 = sshll.u32 [#allocation2], 4
      %s23 = int_to_ptr.vmem [resolvable:$true] %s22
      %25 = dma.hbm_to_vmem [thread:$0]  %s1, 512, %s23, [#allocation3]
    $region9: #{actor_forward.1} parent=1 // pred_fallthru
      _
    // Predicated region
    $region10: #{actor_forward.1} parent=1 // pred_check
      _
    $region11: #{actor_forward.1} parent=1 // pred_check_branch
      %27 = sbr.rel (0) target = $region13
    $region12: #{actor_forward.1} parent=1 // pred_region
      _
    $region13: #{actor_forward.1} parent=1 // pred_fallthru
      _
    // Predicated region
    $region14: #{actor_forward.1} parent=1 // pred_check
      _
    $region15: #{actor_forward.1} parent=1 // pred_check_branch
      %29 = sbr.rel (0) target = $region17
    $region16: #{actor_forward.1} parent=1 // pred_region
      %s31 = ssub.s32 12288, 12288
      %32 = vsyncadd [#allocation5], %s31
      %s33 = sshll.u32 [#allocation4], 4
      %s34 = int_to_ptr.vmem [resolvable:$true] %s33
      %39 = dma.hbm_to_vmem [thread:$0]  %s3, 12288, %s34, [#allocation5], 192, 192, 12
    $region17: #{actor_forward.1} parent=1 // pred_fallthru
      _
    // Predicated region
    $region18: #{actor_forward.1} parent=1 // pred_check
      _
    $region19: #{actor_forward.1} parent=1 // pred_check_branch
      %41 = sbr.rel (0) target = $region21
    $region20: #{actor_forward.1} parent=1 // pred_region
      _
    $region21: #{actor_forward.1} parent=1 // pred_fallthru
      _
    // Predicated region
    $region22: #{actor_forward.1} parent=1 // pred_check
      _
    $region23: #{actor_forward.1} parent=1 // pred_check_branch
      %43 = sbr.rel (0) target = $region25
    $region24: #{actor_forward.1} parent=1 // pred_region
      %s45 = ssub.s32 3072, 3072
      %46 = vsyncadd [#allocation5], %s45
      %s47 = sshll.u32 [#allocation6], 4
      %s48 = int_to_ptr.vmem [resolvable:$true] %s47
      %53 = dma.hbm_to_vmem [thread:$0]  %s5, 3072, %s48, [#allocation5], 64, 64, 4
    $region25: #{actor_forward.1} parent=1 // pred_fallthru
      _
    // Predicated region
    $region26: #{actor_forward.1} parent=1 // pred_check
      _
    $region27: #{actor_forward.1} parent=1 // pred_check_branch
      %55 = sbr.rel (0) target = $region29
    $region28: #{actor_forward.1} parent=1 // pred_region
      _
    $region29: #{actor_forward.1} parent=1 // pred_fallthru
      _
    // Predicated region
    $region30: #{actor_forward.1} parent=1 // pred_check
      _
    $region31: #{actor_forward.1} parent=1 // pred_check_branch
      %57 = sbr.rel (0) target = $region33
    $region32: #{actor_forward.1} parent=1 // pred_region
      %58 = dma.done [#allocation3], 512
    $region33: #{actor_forward.1} parent=1 // pred_fallthru
      _
    // Predicated region
    $region34: #{actor_forward.1} parent=1 // pred_check
      _
    $region35: #{actor_forward.1} parent=1 // pred_check_branch
      %60 = sbr.rel (0) target = $region37
    $region36: #{actor_forward.1} parent=1 // pred_region
      %61 = dma.done [#allocation5], 12288
    $region37: #{actor_forward.1} parent=1 // pred_fallthru
      _
    // Predicated region
    $region38: #{actor_forward.1} parent=1 // pred_check
      _
    $region39: #{actor_forward.1} parent=1 // pred_check_branch
      %63 = sbr.rel (0) target = $region41
    $region40: #{actor_forward.1} parent=1 // pred_region
      %64 = dma.done [#allocation5], 3072
    $region41: #{actor_forward.1} parent=1 // pred_fallthru
      _
    %v66 = vld [vmem:[%s0] sm:$0xff]
    %v67 = vld [vmem:[#allocation2] sm:$0xff]
    %v68 = vld [vmem:[#allocation2 + $0x8] sm:$0xff]
    %v69 = vld [vmem:[#allocation2 + $0x10] sm:$0xff]
    %v70 = vld [vmem:[#allocation2 + $0x18] sm:$0xff]
    %v71 = vld [vmem:[%s2] sm:$0xf]
    %v73 = vlaneseq
    %v74 = vshrl.u32 %v73, 7
    %v75 = vsub.s32 0, %v74
    %v76 = vrot.slane %v71, %v75
    %v77 = vlaneseq
    %v78 = vshrl.u32 %v77, 7
    %v79 = vsub.s32 1, %v78
    %v80 = vrot.slane %v71, %v79
    %v81 = vlaneseq
    %v82 = vshrl.u32 %v81, 7
    %v83 = vsub.s32 2, %v82
    %v84 = vrot.slane %v71, %v83
    %v85 = vlaneseq
    %v86 = vshrl.u32 %v85, 7
    %v87 = vsub.s32 3, %v86
    %v88 = vrot.slane %v71, %v87
    %vm93 = vcmask 64512
    %v95 = vsel %vm93, %v66, 0
    %97 = vmatprep.subr.mxu0 %v68
    %98 = vmatpush1.msra.mxu0 %v67
    %99 = vmatprep.subr.mxu0 0.0
    %100 = vmatpush1.msra.mxu0 0.0
    %101 = vmatprep.subr.mxu0 0.0
    %102 = vmatpush1.msra.mxu0 0.0
    %103 = vmatprep.subr.mxu0 0.0
    %104 = vmatpush1.msra.mxu0 0.0
    %105 = vmatprep.subr.mxu0 0.0
    %106 = vmatpush1.msra.mxu0 0.0
    %107 = vmatprep.subr.mxu0 0.0
    %108 = vmatpush1.msra.mxu0 0.0
    %109 = vmatprep.subr.mxu0 0.0
    %110 = vmatpush1.msra.mxu0 0.0
    %111 = vmatprep.subr.mxu0 0.0
    %112 = vmatpush1.msra.mxu0 0.0
    %113 = vmatprep.subr.mxu0 0.0
    %114 = vmatpush1.msra.mxu0 0.0
    %115 = vmatprep.subr.mxu0 0.0
    %116 = vmatpush1.msra.mxu0 0.0
    %117 = vmatprep.subr.mxu0 0.0
    %118 = vmatpush1.msra.mxu0 0.0
    %119 = vmatprep.subr.mxu0 0.0
    %120 = vmatpush1.msra.mxu0 0.0
    %121 = vmatprep.subr.mxu0 0.0
    %122 = vmatpush1.msra.mxu0 0.0
    %123 = vmatprep.subr.mxu0 0.0
    %124 = vmatpush1.msra.mxu0 0.0
    %125 = vmatprep.subr.mxu0 0.0
    %126 = vmatpush1.msra.mxu0 0.0
    %127 = vmatprep.subr.mxu0 0.0
    %128 = vmatpush1.msra.mxu0 0.0
    %129 = vmatprep.subr.mxu0 0.0
    %130 = vmatpush1.msra.mxu0 0.0
    %131 = vmatprep.subr.mxu0 0.0
    %132 = vmatpush1.msra.mxu0 0.0
    %133 = vmatprep.subr.mxu0 0.0
    %134 = vmatpush1.msra.mxu0 0.0
    %135 = vmatprep.subr.mxu0 0.0
    %136 = vmatpush1.msra.mxu0 0.0
    %137 = vmatprep.subr.mxu0 0.0
    %138 = vmatpush1.msra.mxu0 0.0
    %139 = vmatprep.subr.mxu0 0.0
    %140 = vmatpush1.msra.mxu0 0.0
    %141 = vmatprep.subr.mxu0 0.0
    %142 = vmatpush1.msra.mxu0 0.0
    %143 = vmatprep.subr.mxu0 0.0
    %144 = vmatpush1.msra.mxu0 0.0
    %145 = vmatprep.subr.mxu0 0.0
    %146 = vmatpush1.msra.mxu0 0.0
    %147 = vmatprep.subr.mxu0 0.0
    %148 = vmatpush1.msra.mxu0 0.0
    %149 = vmatprep.subr.mxu0 0.0
    %150 = vmatpush1.msra.mxu0 0.0
    %151 = vmatprep.subr.mxu0 0.0
    %152 = vmatpush1.msra.mxu0 0.0
    %153 = vmatprep.subr.mxu0 0.0
    %154 = vmatpush1.msra.mxu0 0.0
    %155 = vmatprep.subr.mxu0 0.0
    %156 = vmatpush1.msra.mxu0 0.0
    %157 = vmatprep.subr.mxu0 0.0
    %158 = vmatpush1.msra.mxu0 0.0
    %159 = vmatprep.subr.mxu0 0.0
    %160 = vmatpush1.msra.mxu0 0.0
    %161 = vmatprep.mubr.f32.mxu0 0.0
    %162 = vmatmul.mubr.f32.gmra.mrb[0].mxu0 %v95
    %v163 = vpop.f32.mrb[0].mxu0
    %v164 = vadd.f32 %v76, %v163
    %v165 = vpop.f32.mrb[0].mxu0
    %v166 = vadd.f32 %v80, %v165
    %167 = vdwg.mxu0
    %168 = vmatprep.subr.mxu0 %v70
    %169 = vmatpush1.msra.mxu0 %v69
    %170 = vmatprep.subr.mxu0 0.0
    %171 = vmatpush1.msra.mxu0 0.0
    %172 = vmatprep.subr.mxu0 0.0
    %173 = vmatpush1.msra.mxu0 0.0
    %174 = vmatprep.subr.mxu0 0.0
    %175 = vmatpush1.msra.mxu0 0.0
    %176 = vmatprep.subr.mxu0 0.0
    %177 = vmatpush1.msra.mxu0 0.0
    %178 = vmatprep.subr.mxu0 0.0
    %179 = vmatpush1.msra.mxu0 0.0
    %180 = vmatprep.subr.mxu0 0.0
    %181 = vmatpush1.msra.mxu0 0.0
    %182 = vmatprep.subr.mxu0 0.0
    %183 = vmatpush1.msra.mxu0 0.0
    %184 = vmatprep.subr.mxu0 0.0
    %185 = vmatpush1.msra.mxu0 0.0
    %186 = vmatprep.subr.mxu0 0.0
    %187 = vmatpush1.msra.mxu0 0.0
    %188 = vmatprep.subr.mxu0 0.0
    %189 = vmatpush1.msra.mxu0 0.0
    %190 = vmatprep.subr.mxu0 0.0
    %191 = vmatpush1.msra.mxu0 0.0
    %192 = vmatprep.subr.mxu0 0.0
    %193 = vmatpush1.msra.mxu0 0.0
    %194 = vmatprep.subr.mxu0 0.0
    %195 = vmatpush1.msra.mxu0 0.0
    %196 = vmatprep.subr.mxu0 0.0
    %197 = vmatpush1.msra.mxu0 0.0
    %198 = vmatprep.subr.mxu0 0.0
    %199 = vmatpush1.msra.mxu0 0.0
    %200 = vmatprep.subr.mxu0 0.0
    %201 = vmatpush1.msra.mxu0 0.0
    %202 = vmatprep.subr.mxu0 0.0
    %203 = vmatpush1.msra.mxu0 0.0
    %204 = vmatprep.subr.mxu0 0.0
    %205 = vmatpush1.msra.mxu0 0.0
    %206 = vmatprep.subr.mxu0 0.0
    %207 = vmatpush1.msra.mxu0 0.0
    %208 = vmatprep.subr.mxu0 0.0
    %209 = vmatpush1.msra.mxu0 0.0
    %210 = vmatprep.subr.mxu0 0.0
    %211 = vmatpush1.msra.mxu0 0.0
    %212 = vmatprep.subr.mxu0 0.0
    %213 = vmatpush1.msra.mxu0 0.0
    %214 = vmatprep.subr.mxu0 0.0
    %215 = vmatpush1.msra.mxu0 0.0
    %216 = vmatprep.subr.mxu0 0.0
    %217 = vmatpush1.msra.mxu0 0.0
    %218 = vmatprep.subr.mxu0 0.0
    %219 = vmatpush1.msra.mxu0 0.0
    %220 = vmatprep.subr.mxu0 0.0
    %221 = vmatpush1.msra.mxu0 0.0
    %222 = vmatprep.subr.mxu0 0.0
    %223 = vmatpush1.msra.mxu0 0.0
    %224 = vmatprep.subr.mxu0 0.0
    %225 = vmatpush1.msra.mxu0 0.0
    %226 = vmatprep.subr.mxu0 0.0
    %227 = vmatpush1.msra.mxu0 0.0
    %228 = vmatprep.subr.mxu0 0.0
    %229 = vmatpush1.msra.mxu0 0.0
    %230 = vmatprep.subr.mxu0 0.0
    %231 = vmatpush1.msra.mxu0 0.0
    %232 = vmatprep.mubr.f32.mxu0 0.0
    %233 = vmatmul.mubr.f32.gmra.mrb[0].mxu0 %v95
    %v234 = vpop.f32.mrb[0].mxu0
    %v235 = vadd.f32 %v84, %v234
    %v236 = vpop.f32.mrb[0].mxu0
    %v237 = vadd.f32 %v88, %v236
    %238 = vdwg.mxu0
    %v239 = vmax.f32 %v164, 0.0
    %v240 = vmax.f32 %v166, 0.0
    %v241 = vmax.f32 %v235, 0.0
    %v242 = vmax.f32 %v237, 0.0
    %v243 = vpack.c.bf16 %v239, %v239
    %v244 = vpack.c.bf16 %v240, %v240
    %v245 = vpack.c.bf16 %v241, %v241
    %v246 = vpack.c.bf16 %v242, %v242
    %v247 = vld [vmem:[#allocation4] sm:$0xff]
    %v248 = vld [vmem:[#allocation4 + $0x8] sm:$0xf]
    %v249 = vld [vmem:[#allocation4 + $0xc] sm:$0xff]
    %v250 = vld [vmem:[#allocation4 + $0x14] sm:$0xf]
    %v251 = vld [vmem:[#allocation4 + $0x18] sm:$0xff]
    %v252 = vld [vmem:[#allocation4 + $0x20] sm:$0xf]
    %v253 = vld [vmem:[#allocation4 + $0x24] sm:$0xff]
    %v254 = vld [vmem:[#allocation4 + $0x2c] sm:$0xf]
    %v255 = vld [vmem:[#allocation4 + $0x30] sm:$0xff]
    %v256 = vld [vmem:[#allocation4 + $0x38] sm:$0xf]
    %v257 = vld [vmem:[#allocation4 + $0x3c] sm:$0xff]
    %v258 = vld [vmem:[#allocation4 + $0x44] sm:$0xf]
    %v259 = vld [vmem:[#allocation4 + $0x48] sm:$0xff]
    %v260 = vld [vmem:[#allocation4 + $0x50] sm:$0xf]
    %v261 = vld [vmem:[#allocation4 + $0x54] sm:$0xff]
    %v262 = vld [vmem:[#allocation4 + $0x5c] sm:$0xf]
    %v263 = vld [vmem:[#allocation4 + $0x60] sm:$0xff]
    %v264 = vld [vmem:[#allocation4 + $0x68] sm:$0xf]
    %v265 = vld [vmem:[#allocation4 + $0x6c] sm:$0xff]
    %v266 = vld [vmem:[#allocation4 + $0x74] sm:$0xf]
    %v267 = vld [vmem:[#allocation4 + $0x78] sm:$0xff]
    %v268 = vld [vmem:[#allocation4 + $0x80] sm:$0xf]
    %v269 = vld [vmem:[#allocation4 + $0x84] sm:$0xff]
    %v270 = vld [vmem:[#allocation4 + $0x8c] sm:$0xf]
    %v271 = vld [vmem:[#allocation4 + $0x90] sm:$0xff]
    %v272 = vld [vmem:[#allocation4 + $0x98] sm:$0xf]
    %v273 = vld [vmem:[#allocation4 + $0x9c] sm:$0xff]
    %v274 = vld [vmem:[#allocation4 + $0xa4] sm:$0xf]
    %v275 = vld [vmem:[#allocation4 + $0xa8] sm:$0xff]
    %v276 = vld [vmem:[#allocation4 + $0xb0] sm:$0xf]
    %v277 = vld [vmem:[#allocation4 + $0xb4] sm:$0xff]
    %v278 = vld [vmem:[#allocation4 + $0xbc] sm:$0xf]
    %v279 = vld [vmem:[#allocation4 + $0xc0] sm:$0xff]
    %v280 = vld [vmem:[#allocation4 + $0xc8] sm:$0xf]
    %v281 = vld [vmem:[#allocation4 + $0xcc] sm:$0xff]
    %v282 = vld [vmem:[#allocation4 + $0xd4] sm:$0xf]
    %v283 = vld [vmem:[#allocation4 + $0xd8] sm:$0xff]
    %v284 = vld [vmem:[#allocation4 + $0xe0] sm:$0xf]
    %v285 = vld [vmem:[#allocation4 + $0xe4] sm:$0xff]
    %v286 = vld [vmem:[#allocation4 + $0xec] sm:$0xf]
    %v287 = vld [vmem:[#allocation4 + $0xf0] sm:$0xff]
    %v288 = vld [vmem:[#allocation4 + $0xf8] sm:$0xf]
    %v289 = vld [vmem:[#allocation4 + $0xfc] sm:$0xff]
    %v290 = vld [vmem:[#allocation4 + $0x104] sm:$0xf]
    %v291 = vld [vmem:[#allocation4 + $0x108] sm:$0xff]
    %v292 = vld [vmem:[#allocation4 + $0x110] sm:$0xf]
    %v293 = vld [vmem:[#allocation4 + $0x114] sm:$0xff]
    %v294 = vld [vmem:[#allocation4 + $0x11c] sm:$0xf]
    %v295 = vld [vmem:[#allocation4 + $0x120] sm:$0xff]
    %v296 = vld [vmem:[#allocation4 + $0x128] sm:$0xf]
    %v297 = vld [vmem:[#allocation4 + $0x12c] sm:$0xff]
    %v298 = vld [vmem:[#allocation4 + $0x134] sm:$0xf]
    %v299 = vld [vmem:[#allocation4 + $0x138] sm:$0xff]
    %v300 = vld [vmem:[#allocation4 + $0x140] sm:$0xf]
    %v301 = vld [vmem:[#allocation4 + $0x144] sm:$0xff]
    %v302 = vld [vmem:[#allocation4 + $0x14c] sm:$0xf]
    %v303 = vld [vmem:[#allocation4 + $0x150] sm:$0xff]
    %v304 = vld [vmem:[#allocation4 + $0x158] sm:$0xf]
    %v305 = vld [vmem:[#allocation4 + $0x15c] sm:$0xff]
    %v306 = vld [vmem:[#allocation4 + $0x164] sm:$0xf]
    %v307 = vld [vmem:[#allocation4 + $0x168] sm:$0xff]
    %v308 = vld [vmem:[#allocation4 + $0x170] sm:$0xf]
    %v309 = vld [vmem:[#allocation4 + $0x174] sm:$0xff]
    %v310 = vld [vmem:[#allocation4 + $0x17c] sm:$0xf]
    %v311 = vld [vmem:[#allocation4 + $0x180] sm:$0xff]
    %v312 = vld [vmem:[#allocation4 + $0x188] sm:$0xf]
    %v313 = vld [vmem:[#allocation4 + $0x18c] sm:$0xff]
    %v314 = vld [vmem:[#allocation4 + $0x194] sm:$0xf]
    %v315 = vld [vmem:[#allocation4 + $0x198] sm:$0xff]
    %v316 = vld [vmem:[#allocation4 + $0x1a0] sm:$0xf]
    %v317 = vld [vmem:[#allocation4 + $0x1a4] sm:$0xff]
    %v318 = vld [vmem:[#allocation4 + $0x1ac] sm:$0xf]
    %v319 = vld [vmem:[#allocation4 + $0x1b0] sm:$0xff]
    %v320 = vld [vmem:[#allocation4 + $0x1b8] sm:$0xf]
    %v321 = vld [vmem:[#allocation4 + $0x1bc] sm:$0xff]
    %v322 = vld [vmem:[#allocation4 + $0x1c4] sm:$0xf]
    %v323 = vld [vmem:[#allocation4 + $0x1c8] sm:$0xff]
    %v324 = vld [vmem:[#allocation4 + $0x1d0] sm:$0xf]
    %v325 = vld [vmem:[#allocation4 + $0x1d4] sm:$0xff]
    %v326 = vld [vmem:[#allocation4 + $0x1dc] sm:$0xf]
    %v327 = vld [vmem:[#allocation4 + $0x1e0] sm:$0xff]
    %v328 = vld [vmem:[#allocation4 + $0x1e8] sm:$0xf]
    %v329 = vld [vmem:[#allocation4 + $0x1ec] sm:$0xff]
    %v330 = vld [vmem:[#allocation4 + $0x1f4] sm:$0xf]
    %v331 = vld [vmem:[#allocation4 + $0x1f8] sm:$0xff]
    %v332 = vld [vmem:[#allocation4 + $0x200] sm:$0xf]
    %v333 = vld [vmem:[#allocation4 + $0x204] sm:$0xff]
    %v334 = vld [vmem:[#allocation4 + $0x20c] sm:$0xf]
    %v335 = vld [vmem:[#allocation4 + $0x210] sm:$0xff]
    %v336 = vld [vmem:[#allocation4 + $0x218] sm:$0xf]
    %v337 = vld [vmem:[#allocation4 + $0x21c] sm:$0xff]
    %v338 = vld [vmem:[#allocation4 + $0x224] sm:$0xf]
    %v339 = vld [vmem:[#allocation4 + $0x228] sm:$0xff]
    %v340 = vld [vmem:[#allocation4 + $0x230] sm:$0xf]
    %v341 = vld [vmem:[#allocation4 + $0x234] sm:$0xff]
    %v342 = vld [vmem:[#allocation4 + $0x23c] sm:$0xf]
    %v343 = vld [vmem:[#allocation4 + $0x240] sm:$0xff]
    %v344 = vld [vmem:[#allocation4 + $0x248] sm:$0xf]
    %v345 = vld [vmem:[#allocation4 + $0x24c] sm:$0xff]
    %v346 = vld [vmem:[#allocation4 + $0x254] sm:$0xf]
    %v347 = vld [vmem:[#allocation4 + $0x258] sm:$0xff]
    %v348 = vld [vmem:[#allocation4 + $0x260] sm:$0xf]
    %v349 = vld [vmem:[#allocation4 + $0x264] sm:$0xff]
    %v350 = vld [vmem:[#allocation4 + $0x26c] sm:$0xf]
    %v351 = vld [vmem:[#allocation4 + $0x270] sm:$0xff]
    %v352 = vld [vmem:[#allocation4 + $0x278] sm:$0xf]
    %v353 = vld [vmem:[#allocation4 + $0x27c] sm:$0xff]
    %v354 = vld [vmem:[#allocation4 + $0x284] sm:$0xf]
    %v355 = vld [vmem:[#allocation4 + $0x288] sm:$0xff]
    %v356 = vld [vmem:[#allocation4 + $0x290] sm:$0xf]
    %v357 = vld [vmem:[#allocation4 + $0x294] sm:$0xff]
    %v358 = vld [vmem:[#allocation4 + $0x29c] sm:$0xf]
    %v359 = vld [vmem:[#allocation4 + $0x2a0] sm:$0xff]
    %v360 = vld [vmem:[#allocation4 + $0x2a8] sm:$0xf]
    %v361 = vld [vmem:[#allocation4 + $0x2ac] sm:$0xff]
    %v362 = vld [vmem:[#allocation4 + $0x2b4] sm:$0xf]
    %v363 = vld [vmem:[#allocation4 + $0x2b8] sm:$0xff]
    %v364 = vld [vmem:[#allocation4 + $0x2c0] sm:$0xf]
    %v365 = vld [vmem:[#allocation4 + $0x2c4] sm:$0xff]
    %v366 = vld [vmem:[#allocation4 + $0x2cc] sm:$0xf]
    %v367 = vld [vmem:[#allocation4 + $0x2d0] sm:$0xff]
    %v368 = vld [vmem:[#allocation4 + $0x2d8] sm:$0xf]
    %v369 = vld [vmem:[#allocation4 + $0x2dc] sm:$0xff]
    %v370 = vld [vmem:[#allocation4 + $0x2e4] sm:$0xf]
    %v371 = vld [vmem:[#allocation4 + $0x2e8] sm:$0xff]
    %v372 = vld [vmem:[#allocation4 + $0x2f0] sm:$0xf]
    %v373 = vld [vmem:[#allocation4 + $0x2f4] sm:$0xff]
    %v374 = vld [vmem:[#allocation4 + $0x2fc] sm:$0xf]
    %v375 = vld [vmem:[%s4] sm:$0x7]
    %v377 = vlaneseq
    %v378 = vshrl.u32 %v377, 7
    %v379 = vsub.s32 0, %v378
    %v380 = vrot.slane %v375, %v379
    %v381 = vlaneseq
    %v382 = vshrl.u32 %v381, 7
    %v383 = vsub.s32 1, %v382
    %v384 = vrot.slane %v375, %v383
    %v385 = vlaneseq
    %v386 = vshrl.u32 %v385, 7
    %v387 = vsub.s32 2, %v386
    %v388 = vrot.slane %v375, %v387
    %v520 = vunpack.c.l.b16 %v247
    %v521 = vunpack.c.h.b16 %v247
    %v522 = vunpack.c.l.b16 %v248
    %v523 = vunpack.c.l.b16 %v249
    %v524 = vunpack.c.h.b16 %v249
    %v525 = vunpack.c.l.b16 %v250
    %v526 = vunpack.c.l.b16 %v251
    %v527 = vunpack.c.h.b16 %v251
    %v528 = vunpack.c.l.b16 %v252
    %v529 = vunpack.c.l.b16 %v253
    %v530 = vunpack.c.h.b16 %v253
    %v531 = vunpack.c.l.b16 %v254
    %v532 = vunpack.c.l.b16 %v255
    %v533 = vunpack.c.h.b16 %v255
    %v534 = vunpack.c.l.b16 %v256
    %v535 = vunpack.c.l.b16 %v257
    %v536 = vunpack.c.h.b16 %v257
    %v537 = vunpack.c.l.b16 %v258
    %v538 = vunpack.c.l.b16 %v259
    %v539 = vunpack.c.h.b16 %v259
    %v540 = vunpack.c.l.b16 %v260
    %v541 = vunpack.c.l.b16 %v261
    %v542 = vunpack.c.h.b16 %v261
    %v543 = vunpack.c.l.b16 %v262
    %v544 = vunpack.c.l.b16 %v263
    %v545 = vunpack.c.h.b16 %v263
    %v546 = vunpack.c.l.b16 %v264
    %v547 = vunpack.c.l.b16 %v265
    %v548 = vunpack.c.h.b16 %v265
    %v549 = vunpack.c.l.b16 %v266
    %v550 = vunpack.c.l.b16 %v267
    %v551 = vunpack.c.h.b16 %v267
    %v552 = vunpack.c.l.b16 %v268
    %v553 = vunpack.c.l.b16 %v269
    %v554 = vunpack.c.h.b16 %v269
    %v555 = vunpack.c.l.b16 %v270
    %v556 = vunpack.c.l.b16 %v271
    %v557 = vunpack.c.h.b16 %v271
    %v558 = vunpack.c.l.b16 %v272
    %v559 = vunpack.c.l.b16 %v273
    %v560 = vunpack.c.h.b16 %v273
    %v561 = vunpack.c.l.b16 %v274
    %v562 = vunpack.c.l.b16 %v275
    %v563 = vunpack.c.h.b16 %v275
    %v564 = vunpack.c.l.b16 %v276
    %v565 = vunpack.c.l.b16 %v277
    %v566 = vunpack.c.h.b16 %v277
    %v567 = vunpack.c.l.b16 %v278
    %v568 = vunpack.c.l.b16 %v279
    %v569 = vunpack.c.h.b16 %v279
    %v570 = vunpack.c.l.b16 %v280
    %v571 = vunpack.c.l.b16 %v281
    %v572 = vunpack.c.h.b16 %v281
    %v573 = vunpack.c.l.b16 %v282
    %v574 = vunpack.c.l.b16 %v283
    %v575 = vunpack.c.h.b16 %v283
    %v576 = vunpack.c.l.b16 %v284
    %v577 = vunpack.c.l.b16 %v285
    %v578 = vunpack.c.h.b16 %v285
    %v579 = vunpack.c.l.b16 %v286
    %v580 = vunpack.c.l.b16 %v287
    %v581 = vunpack.c.h.b16 %v287
    %v582 = vunpack.c.l.b16 %v288
    %v583 = vunpack.c.l.b16 %v289
    %v584 = vunpack.c.h.b16 %v289
    %v585 = vunpack.c.l.b16 %v290
    %v586 = vunpack.c.l.b16 %v291
    %v587 = vunpack.c.h.b16 %v291
    %v588 = vunpack.c.l.b16 %v292
    %v589 = vunpack.c.l.b16 %v293
    %v590 = vunpack.c.h.b16 %v293
    %v591 = vunpack.c.l.b16 %v294
    %v592 = vunpack.c.l.b16 %v295
    %v593 = vunpack.c.h.b16 %v295
    %v594 = vunpack.c.l.b16 %v296
    %v595 = vunpack.c.l.b16 %v297
    %v596 = vunpack.c.h.b16 %v297
    %v597 = vunpack.c.l.b16 %v298
    %v598 = vunpack.c.l.b16 %v299
    %v599 = vunpack.c.h.b16 %v299
    %v600 = vunpack.c.l.b16 %v300
    %v601 = vunpack.c.l.b16 %v301
    %v602 = vunpack.c.h.b16 %v301
    %v603 = vunpack.c.l.b16 %v302
    %v604 = vunpack.c.l.b16 %v303
    %v605 = vunpack.c.h.b16 %v303
    %v606 = vunpack.c.l.b16 %v304
    %v607 = vunpack.c.l.b16 %v305
    %v608 = vunpack.c.h.b16 %v305
    %v609 = vunpack.c.l.b16 %v306
    %v610 = vunpack.c.l.b16 %v307
    %v611 = vunpack.c.h.b16 %v307
    %v612 = vunpack.c.l.b16 %v308
    %v613 = vunpack.c.l.b16 %v309
    %v614 = vunpack.c.h.b16 %v309
    %v615 = vunpack.c.l.b16 %v310
    %v616 = vunpack.c.l.b16 %v311
    %v617 = vunpack.c.h.b16 %v311
    %v618 = vunpack.c.l.b16 %v312
    %v619 = vunpack.c.l.b16 %v313
    %v620 = vunpack.c.h.b16 %v313
    %v621 = vunpack.c.l.b16 %v314
    %v622 = vunpack.c.l.b16 %v315
    %v623 = vunpack.c.h.b16 %v315
    %v624 = vunpack.c.l.b16 %v316
    %v625 = vunpack.c.l.b16 %v317
    %v626 = vunpack.c.h.b16 %v317
    %v627 = vunpack.c.l.b16 %v318
    %v628 = vunpack.c.l.b16 %v319
    %v629 = vunpack.c.h.b16 %v319
    %v630 = vunpack.c.l.b16 %v320
    %v631 = vunpack.c.l.b16 %v321
    %v632 = vunpack.c.h.b16 %v321
    %v633 = vunpack.c.l.b16 %v322
    %v634 = vunpack.c.l.b16 %v323
    %v635 = vunpack.c.h.b16 %v323
    %v636 = vunpack.c.l.b16 %v324
    %v637 = vunpack.c.l.b16 %v325
    %v638 = vunpack.c.h.b16 %v325
    %v639 = vunpack.c.l.b16 %v326
    %v640 = vunpack.c.l.b16 %v327
    %v641 = vunpack.c.h.b16 %v327
    %v642 = vunpack.c.l.b16 %v328
    %v643 = vunpack.c.l.b16 %v329
    %v644 = vunpack.c.h.b16 %v329
    %v645 = vunpack.c.l.b16 %v330
    %v646 = vunpack.c.l.b16 %v331
    %v647 = vunpack.c.h.b16 %v331
    %v648 = vunpack.c.l.b16 %v332
    %v649 = vunpack.c.l.b16 %v333
    %v650 = vunpack.c.h.b16 %v333
    %v651 = vunpack.c.l.b16 %v334
    %v652 = vunpack.c.l.b16 %v335
    %v653 = vunpack.c.h.b16 %v335
    %v654 = vunpack.c.l.b16 %v336
    %v655 = vunpack.c.l.b16 %v337
    %v656 = vunpack.c.h.b16 %v337
    %v657 = vunpack.c.l.b16 %v338
    %v658 = vunpack.c.l.b16 %v339
    %v659 = vunpack.c.h.b16 %v339
    %v660 = vunpack.c.l.b16 %v340
    %v661 = vunpack.c.l.b16 %v341
    %v662 = vunpack.c.h.b16 %v341
    %v663 = vunpack.c.l.b16 %v342
    %v664 = vunpack.c.l.b16 %v343
    %v665 = vunpack.c.h.b16 %v343
    %v666 = vunpack.c.l.b16 %v344
    %v667 = vunpack.c.l.b16 %v345
    %v668 = vunpack.c.h.b16 %v345
    %v669 = vunpack.c.l.b16 %v346
    %v670 = vunpack.c.l.b16 %v347
    %v671 = vunpack.c.h.b16 %v347
    %v672 = vunpack.c.l.b16 %v348
    %v673 = vunpack.c.l.b16 %v349
    %v674 = vunpack.c.h.b16 %v349
    %v675 = vunpack.c.l.b16 %v350
    %v676 = vunpack.c.l.b16 %v351
    %v677 = vunpack.c.h.b16 %v351
    %v678 = vunpack.c.l.b16 %v352
    %v679 = vunpack.c.l.b16 %v353
    %v680 = vunpack.c.h.b16 %v353
    %v681 = vunpack.c.l.b16 %v354
    %v682 = vunpack.c.l.b16 %v355
    %v683 = vunpack.c.h.b16 %v355
    %v684 = vunpack.c.l.b16 %v356
    %v685 = vunpack.c.l.b16 %v357
    %v686 = vunpack.c.h.b16 %v357
    %v687 = vunpack.c.l.b16 %v358
    %v688 = vunpack.c.l.b16 %v359
    %v689 = vunpack.c.h.b16 %v359
    %v690 = vunpack.c.l.b16 %v360
    %v691 = vunpack.c.l.b16 %v361
    %v692 = vunpack.c.h.b16 %v361
    %v693 = vunpack.c.l.b16 %v362
    %v694 = vunpack.c.l.b16 %v363
    %v695 = vunpack.c.h.b16 %v363
    %v696 = vunpack.c.l.b16 %v364
    %v697 = vunpack.c.l.b16 %v365
    %v698 = vunpack.c.h.b16 %v365
    %v699 = vunpack.c.l.b16 %v366
    %v700 = vunpack.c.l.b16 %v367
    %v701 = vunpack.c.h.b16 %v367
    %v702 = vunpack.c.l.b16 %v368
    %v703 = vunpack.c.l.b16 %v369
    %v704 = vunpack.c.h.b16 %v369
    %v705 = vunpack.c.l.b16 %v370
    %v706 = vunpack.c.l.b16 %v371
    %v707 = vunpack.c.h.b16 %v371
    %v708 = vunpack.c.l.b16 %v372
    %v709 = vunpack.c.l.b16 %v373
    %v710 = vunpack.c.h.b16 %v373
    %v711 = vunpack.c.l.b16 %v374
    %v712 = vpack.c.b16 %v523, %v520
    %v713 = vpack.c.b16 %v524, %v521
    %v714 = vpack.c.b16 %v525, %v522
    %v715 = vpack.c.b16 %v529, %v526
    %v716 = vpack.c.b16 %v530, %v527
    %v717 = vpack.c.b16 %v531, %v528
    %v718 = vpack.c.b16 %v535, %v532
    %v719 = vpack.c.b16 %v536, %v533
    %v720 = vpack.c.b16 %v537, %v534
    %v721 = vpack.c.b16 %v541, %v538
    %v722 = vpack.c.b16 %v542, %v539
    %v723 = vpack.c.b16 %v543, %v540
    %v724 = vpack.c.b16 %v547, %v544
    %v725 = vpack.c.b16 %v548, %v545
    %v726 = vpack.c.b16 %v549, %v546
    %v727 = vpack.c.b16 %v553, %v550
    %v728 = vpack.c.b16 %v554, %v551
    %v729 = vpack.c.b16 %v555, %v552
    %v730 = vpack.c.b16 %v559, %v556
    %v731 = vpack.c.b16 %v560, %v557
    %v732 = vpack.c.b16 %v561, %v558
    %v733 = vpack.c.b16 %v565, %v562
    %v734 = vpack.c.b16 %v566, %v563
    %v735 = vpack.c.b16 %v567, %v564
    %v736 = vpack.c.b16 %v571, %v568
    %v737 = vpack.c.b16 %v572, %v569
    %v738 = vpack.c.b16 %v573, %v570
    %v739 = vpack.c.b16 %v577, %v574
    %v740 = vpack.c.b16 %v578, %v575
    %v741 = vpack.c.b16 %v579, %v576
    %v742 = vpack.c.b16 %v583, %v580
    %v743 = vpack.c.b16 %v584, %v581
    %v744 = vpack.c.b16 %v585, %v582
    %v745 = vpack.c.b16 %v589, %v586
    %v746 = vpack.c.b16 %v590, %v587
    %v747 = vpack.c.b16 %v591, %v588
    %v748 = vpack.c.b16 %v595, %v592
    %v749 = vpack.c.b16 %v596, %v593
    %v750 = vpack.c.b16 %v597, %v594
    %v751 = vpack.c.b16 %v601, %v598
    %v752 = vpack.c.b16 %v602, %v599
    %v753 = vpack.c.b16 %v603, %v600
    %v754 = vpack.c.b16 %v607, %v604
    %v755 = vpack.c.b16 %v608, %v605
    %v756 = vpack.c.b16 %v609, %v606
    %v757 = vpack.c.b16 %v613, %v610
    %v758 = vpack.c.b16 %v614, %v611
    %v759 = vpack.c.b16 %v615, %v612
    %v760 = vpack.c.b16 %v619, %v616
    %v761 = vpack.c.b16 %v620, %v617
    %v762 = vpack.c.b16 %v621, %v618
    %v763 = vpack.c.b16 %v625, %v622
    %v764 = vpack.c.b16 %v626, %v623
    %v765 = vpack.c.b16 %v627, %v624
    %v766 = vpack.c.b16 %v631, %v628
    %v767 = vpack.c.b16 %v632, %v629
    %v768 = vpack.c.b16 %v633, %v630
    %v769 = vpack.c.b16 %v637, %v634
    %v770 = vpack.c.b16 %v638, %v635
    %v771 = vpack.c.b16 %v639, %v636
    %v772 = vpack.c.b16 %v643, %v640
    %v773 = vpack.c.b16 %v644, %v641
    %v774 = vpack.c.b16 %v645, %v642
    %v775 = vpack.c.b16 %v649, %v646
    %v776 = vpack.c.b16 %v650, %v647
    %v777 = vpack.c.b16 %v651, %v648
    %v778 = vpack.c.b16 %v655, %v652
    %v779 = vpack.c.b16 %v656, %v653
    %v780 = vpack.c.b16 %v657, %v654
    %v781 = vpack.c.b16 %v661, %v658
    %v782 = vpack.c.b16 %v662, %v659
    %v783 = vpack.c.b16 %v663, %v660
    %v784 = vpack.c.b16 %v667, %v664
    %v785 = vpack.c.b16 %v668, %v665
    %v786 = vpack.c.b16 %v669, %v666
    %v787 = vpack.c.b16 %v673, %v670
    %v788 = vpack.c.b16 %v674, %v671
    %v789 = vpack.c.b16 %v675, %v672
    %v790 = vpack.c.b16 %v679, %v676
    %v791 = vpack.c.b16 %v680, %v677
    %v792 = vpack.c.b16 %v681, %v678
    %v793 = vpack.c.b16 %v685, %v682
    %v794 = vpack.c.b16 %v686, %v683
    %v795 = vpack.c.b16 %v687, %v684
    %v796 = vpack.c.b16 %v691, %v688
    %v797 = vpack.c.b16 %v692, %v689
    %v798 = vpack.c.b16 %v693, %v690
    %v799 = vpack.c.b16 %v697, %v694
    %v800 = vpack.c.b16 %v698, %v695
    %v801 = vpack.c.b16 %v699, %v696
    %v802 = vpack.c.b16 %v703, %v700
    %v803 = vpack.c.b16 %v704, %v701
    %v804 = vpack.c.b16 %v705, %v702
    %v805 = vpack.c.b16 %v709, %v706
    %v806 = vpack.c.b16 %v710, %v707
    %v807 = vpack.c.b16 %v711, %v708
    %904 = vmatprep.subr.bf16.mxu0 %v713
    %905 = vmatpush1.bf16.msra.mxu0 %v712
    %906 = vmatprep.subr.bf16.mxu0 %v716
    %907 = vmatpush1.bf16.msra.mxu0 %v715
    %908 = vmatprep.subr.bf16.mxu0 %v719
    %909 = vmatpush1.bf16.msra.mxu0 %v718
    %910 = vmatprep.subr.bf16.mxu0 %v722
    %911 = vmatpush1.bf16.msra.mxu0 %v721
    %912 = vmatprep.subr.bf16.mxu0 %v725
    %913 = vmatpush1.bf16.msra.mxu0 %v724
    %914 = vmatprep.subr.bf16.mxu0 %v728
    %915 = vmatpush1.bf16.msra.mxu0 %v727
    %916 = vmatprep.subr.bf16.mxu0 %v731
    %917 = vmatpush1.bf16.msra.mxu0 %v730
    %918 = vmatprep.subr.bf16.mxu0 %v734
    %919 = vmatpush1.bf16.msra.mxu0 %v733
    %920 = vmatprep.subr.bf16.mxu0 %v737
    %921 = vmatpush1.bf16.msra.mxu0 %v736
    %922 = vmatprep.subr.bf16.mxu0 %v740
    %923 = vmatpush1.bf16.msra.mxu0 %v739
    %924 = vmatprep.subr.bf16.mxu0 %v743
    %925 = vmatpush1.bf16.msra.mxu0 %v742
    %926 = vmatprep.subr.bf16.mxu0 %v746
    %927 = vmatpush1.bf16.msra.mxu0 %v745
    %928 = vmatprep.subr.bf16.mxu0 %v749
    %929 = vmatpush1.bf16.msra.mxu0 %v748
    %930 = vmatprep.subr.bf16.mxu0 %v752
    %931 = vmatpush1.bf16.msra.mxu0 %v751
    %932 = vmatprep.subr.bf16.mxu0 %v755
    %933 = vmatpush1.bf16.msra.mxu0 %v754
    %934 = vmatprep.subr.bf16.mxu0 %v758
    %935 = vmatpush1.bf16.msra.mxu0 %v757
    %936 = vmatprep.mubr.bf16.mxu0 %v244
    %937 = vmatmul.mubr.bf16.gmra.mrb[0].mxu0 %v243
    %v938 = vpop.f32.mrb[0].mxu0
    %v939 = vadd.f32 %v380, %v938
    %v940 = vpop.f32.mrb[0].mxu0
    %v941 = vadd.f32 %v384, %v940
    %v942 = vpop.f32.mrb[0].mxu0
    %v943 = vpop.f32.mrb[0].mxu0
    %944 = vdwg.mxu0
    %945 = vmatprep.subr.bf16.mxu0 %v761
    %946 = vmatpush1.bf16.msra.mxu0 %v760
    %947 = vmatprep.subr.bf16.mxu0 %v764
    %948 = vmatpush1.bf16.msra.mxu0 %v763
    %949 = vmatprep.subr.bf16.mxu0 %v767
    %950 = vmatpush1.bf16.msra.mxu0 %v766
    %951 = vmatprep.subr.bf16.mxu0 %v770
    %952 = vmatpush1.bf16.msra.mxu0 %v769
    %953 = vmatprep.subr.bf16.mxu0 %v773
    %954 = vmatpush1.bf16.msra.mxu0 %v772
    %955 = vmatprep.subr.bf16.mxu0 %v776
    %956 = vmatpush1.bf16.msra.mxu0 %v775
    %957 = vmatprep.subr.bf16.mxu0 %v779
    %958 = vmatpush1.bf16.msra.mxu0 %v778
    %959 = vmatprep.subr.bf16.mxu0 %v782
    %960 = vmatpush1.bf16.msra.mxu0 %v781
    %961 = vmatprep.subr.bf16.mxu0 %v785
    %962 = vmatpush1.bf16.msra.mxu0 %v784
    %963 = vmatprep.subr.bf16.mxu0 %v788
    %964 = vmatpush1.bf16.msra.mxu0 %v787
    %965 = vmatprep.subr.bf16.mxu0 %v791
    %966 = vmatpush1.bf16.msra.mxu0 %v790
    %967 = vmatprep.subr.bf16.mxu0 %v794
    %968 = vmatpush1.bf16.msra.mxu0 %v793
    %969 = vmatprep.subr.bf16.mxu0 %v797
    %970 = vmatpush1.bf16.msra.mxu0 %v796
    %971 = vmatprep.subr.bf16.mxu0 %v800
    %972 = vmatpush1.bf16.msra.mxu0 %v799
    %973 = vmatprep.subr.bf16.mxu0 %v803
    %974 = vmatpush1.bf16.msra.mxu0 %v802
    %975 = vmatprep.subr.bf16.mxu0 %v806
    %976 = vmatpush1.bf16.msra.mxu0 %v805
    %977 = vmatprep.mubr.bf16.mxu0 %v246
    %978 = vmatmul.mubr.bf16.gmra.mrb[0].mxu0 %v245
    %v979 = vpop.f32.mrb[0].mxu0
    %v980 = vadd.f32 %v939, %v979
    %v981 = vpop.f32.mrb[0].mxu0
    %v982 = vadd.f32 %v941, %v981
    %v983 = vpop.f32.mrb[0].mxu0
    %v984 = vpop.f32.mrb[0].mxu0
    %985 = vdwg.mxu0
    %986 = vmatprep.subr.bf16.mxu0 0
    %987 = vmatpush1.bf16.msra.mxu0 %v714
    %988 = vmatprep.subr.bf16.mxu0 0
    %989 = vmatpush1.bf16.msra.mxu0 %v717
    %990 = vmatprep.subr.bf16.mxu0 0
    %991 = vmatpush1.bf16.msra.mxu0 %v720
    %992 = vmatprep.subr.bf16.mxu0 0
    %993 = vmatpush1.bf16.msra.mxu0 %v723
    %994 = vmatprep.subr.bf16.mxu0 0
    %995 = vmatpush1.bf16.msra.mxu0 %v726
    %996 = vmatprep.subr.bf16.mxu0 0
    %997 = vmatpush1.bf16.msra.mxu0 %v729
    %998 = vmatprep.subr.bf16.mxu0 0
    %999 = vmatpush1.bf16.msra.mxu0 %v732
    %1000 = vmatprep.subr.bf16.mxu0 0
    %1001 = vmatpush1.bf16.msra.mxu0 %v735
    %1002 = vmatprep.subr.bf16.mxu0 0
    %1003 = vmatpush1.bf16.msra.mxu0 %v738
    %1004 = vmatprep.subr.bf16.mxu0 0
    %1005 = vmatpush1.bf16.msra.mxu0 %v741
    %1006 = vmatprep.subr.bf16.mxu0 0
    %1007 = vmatpush1.bf16.msra.mxu0 %v744
    %1008 = vmatprep.subr.bf16.mxu0 0
    %1009 = vmatpush1.bf16.msra.mxu0 %v747
    %1010 = vmatprep.subr.bf16.mxu0 0
    %1011 = vmatpush1.bf16.msra.mxu0 %v750
    %1012 = vmatprep.subr.bf16.mxu0 0
    %1013 = vmatpush1.bf16.msra.mxu0 %v753
    %1014 = vmatprep.subr.bf16.mxu0 0
    %1015 = vmatpush1.bf16.msra.mxu0 %v756
    %1016 = vmatprep.subr.bf16.mxu0 0
    %1017 = vmatpush1.bf16.msra.mxu0 %v759
    %1018 = vmatprep.mubr.bf16.mxu0 %v244
    %1019 = vmatmul.mubr.bf16.gmra.mrb[0].mxu0 %v243
    %v1020 = vpop.f32.mrb[0].mxu0
    %v1021 = vadd.f32 %v388, %v1020
    %v1022 = vpop.f32.mrb[0].mxu0
    %v1023 = vpop.f32.mrb[0].mxu0
    %v1024 = vpop.f32.mrb[0].mxu0
    %1025 = vdwg.mxu0
    %1026 = vmatprep.subr.bf16.mxu0 0
    %1027 = vmatpush1.bf16.msra.mxu0 %v762
    %1028 = vmatprep.subr.bf16.mxu0 0
    %1029 = vmatpush1.bf16.msra.mxu0 %v765
    %1030 = vmatprep.subr.bf16.mxu0 0
    %1031 = vmatpush1.bf16.msra.mxu0 %v768
    %1032 = vmatprep.subr.bf16.mxu0 0
    %1033 = vmatpush1.bf16.msra.mxu0 %v771
    %1034 = vmatprep.subr.bf16.mxu0 0
    %1035 = vmatpush1.bf16.msra.mxu0 %v774
    %1036 = vmatprep.subr.bf16.mxu0 0
    %1037 = vmatpush1.bf16.msra.mxu0 %v777
    %1038 = vmatprep.subr.bf16.mxu0 0
    %1039 = vmatpush1.bf16.msra.mxu0 %v780
    %1040 = vmatprep.subr.bf16.mxu0 0
    %1041 = vmatpush1.bf16.msra.mxu0 %v783
    %1042 = vmatprep.subr.bf16.mxu0 0
    %1043 = vmatpush1.bf16.msra.mxu0 %v786
    %1044 = vmatprep.subr.bf16.mxu0 0
    %1045 = vmatpush1.bf16.msra.mxu0 %v789
    %1046 = vmatprep.subr.bf16.mxu0 0
    %1047 = vmatpush1.bf16.msra.mxu0 %v792
    %1048 = vmatprep.subr.bf16.mxu0 0
    %1049 = vmatpush1.bf16.msra.mxu0 %v795
    %1050 = vmatprep.subr.bf16.mxu0 0
    %1051 = vmatpush1.bf16.msra.mxu0 %v798
    %1052 = vmatprep.subr.bf16.mxu0 0
    %1053 = vmatpush1.bf16.msra.mxu0 %v801
    %1054 = vmatprep.subr.bf16.mxu0 0
    %1055 = vmatpush1.bf16.msra.mxu0 %v804
    %1056 = vmatprep.subr.bf16.mxu0 0
    %1057 = vmatpush1.bf16.msra.mxu0 %v807
    %1058 = vmatprep.mubr.bf16.mxu0 %v246
    %1059 = vmatmul.mubr.bf16.gmra.mrb[0].mxu0 %v245
    %v1060 = vpop.f32.mrb[0].mxu0
    %v1061 = vadd.f32 %v1021, %v1060
    %v1062 = vpop.f32.mrb[0].mxu0
    %v1063 = vpop.f32.mrb[0].mxu0
    %v1064 = vpop.f32.mrb[0].mxu0
    %1065 = vdwg.mxu0
    %v1066 = vmax.f32 %v980, 0.0
    %v1067 = vmax.f32 %v982, 0.0
    %v1068 = vmax.f32 %v1061, 0.0
    %v1069 = vpack.c.bf16 %v1066, %v1066
    %v1070 = vpack.c.bf16 %v1067, %v1067
    %v1071 = vpack.c.bf16 %v1068, %v1068
    %v1072 = vld [vmem:[#allocation6] sm:$0xf]
    %v1073 = vld [vmem:[#allocation6 + $0x4] sm:$0xf]
    %v1074 = vld [vmem:[#allocation6 + $0x8] sm:$0xf]
    %v1075 = vld [vmem:[#allocation6 + $0xc] sm:$0xf]
    %v1076 = vld [vmem:[#allocation6 + $0x10] sm:$0xf]
    %v1077 = vld [vmem:[#allocation6 + $0x14] sm:$0xf]
    %v1078 = vld [vmem:[#allocation6 + $0x18] sm:$0xf]
    %v1079 = vld [vmem:[#allocation6 + $0x1c] sm:$0xf]
    %v1080 = vld [vmem:[#allocation6 + $0x20] sm:$0xf]
    %v1081 = vld [vmem:[#allocation6 + $0x24] sm:$0xf]
    %v1082 = vld [vmem:[#allocation6 + $0x28] sm:$0xf]
    %v1083 = vld [vmem:[#allocation6 + $0x2c] sm:$0xf]
    %v1084 = vld [vmem:[#allocation6 + $0x30] sm:$0xf]
    %v1085 = vld [vmem:[#allocation6 + $0x34] sm:$0xf]
    %v1086 = vld [vmem:[#allocation6 + $0x38] sm:$0xf]
    %v1087 = vld [vmem:[#allocation6 + $0x3c] sm:$0xf]
    %v1088 = vld [vmem:[#allocation6 + $0x40] sm:$0xf]
    %v1089 = vld [vmem:[#allocation6 + $0x44] sm:$0xf]
    %v1090 = vld [vmem:[#allocation6 + $0x48] sm:$0xf]
    %v1091 = vld [vmem:[#allocation6 + $0x4c] sm:$0xf]
    %v1092 = vld [vmem:[#allocation6 + $0x50] sm:$0xf]
    %v1093 = vld [vmem:[#allocation6 + $0x54] sm:$0xf]
    %v1094 = vld [vmem:[#allocation6 + $0x58] sm:$0xf]
    %v1095 = vld [vmem:[#allocation6 + $0x5c] sm:$0xf]
    %v1096 = vld [vmem:[#allocation6 + $0x60] sm:$0xf]
    %v1097 = vld [vmem:[#allocation6 + $0x64] sm:$0xf]
    %v1098 = vld [vmem:[#allocation6 + $0x68] sm:$0xf]
    %v1099 = vld [vmem:[#allocation6 + $0x6c] sm:$0xf]
    %v1100 = vld [vmem:[#allocation6 + $0x70] sm:$0xf]
    %v1101 = vld [vmem:[#allocation6 + $0x74] sm:$0xf]
    %v1102 = vld [vmem:[#allocation6 + $0x78] sm:$0xf]
    %v1103 = vld [vmem:[#allocation6 + $0x7c] sm:$0xf]
    %v1104 = vld [vmem:[#allocation6 + $0x80] sm:$0xf]
    %v1105 = vld [vmem:[#allocation6 + $0x84] sm:$0xf]
    %v1106 = vld [vmem:[#allocation6 + $0x88] sm:$0xf]
    %v1107 = vld [vmem:[#allocation6 + $0x8c] sm:$0xf]
    %v1108 = vld [vmem:[#allocation6 + $0x90] sm:$0xf]
    %v1109 = vld [vmem:[#allocation6 + $0x94] sm:$0xf]
    %v1110 = vld [vmem:[#allocation6 + $0x98] sm:$0xf]
    %v1111 = vld [vmem:[#allocation6 + $0x9c] sm:$0xf]
    %v1112 = vld [vmem:[#allocation6 + $0xa0] sm:$0xf]
    %v1113 = vld [vmem:[#allocation6 + $0xa4] sm:$0xf]
    %v1114 = vld [vmem:[#allocation6 + $0xa8] sm:$0xf]
    %v1115 = vld [vmem:[#allocation6 + $0xac] sm:$0xf]
    %v1116 = vld [vmem:[#allocation6 + $0xb0] sm:$0xf]
    %v1117 = vld [vmem:[#allocation6 + $0xb4] sm:$0xf]
    %v1118 = vld [vmem:[#allocation6 + $0xb8] sm:$0xf]
    %v1119 = vld [vmem:[#allocation6 + $0xbc] sm:$0xf]
    %v1168 = vunpack.c.l.b16 %v1072
    %v1169 = vunpack.c.l.b16 %v1073
    %v1170 = vunpack.c.l.b16 %v1074
    %v1171 = vunpack.c.l.b16 %v1075
    %v1172 = vunpack.c.l.b16 %v1076
    %v1173 = vunpack.c.l.b16 %v1077
    %v1174 = vunpack.c.l.b16 %v1078
    %v1175 = vunpack.c.l.b16 %v1079
    %v1176 = vunpack.c.l.b16 %v1080
    %v1177 = vunpack.c.l.b16 %v1081
    %v1178 = vunpack.c.l.b16 %v1082
    %v1179 = vunpack.c.l.b16 %v1083
    %v1180 = vunpack.c.l.b16 %v1084
    %v1181 = vunpack.c.l.b16 %v1085
    %v1182 = vunpack.c.l.b16 %v1086
    %v1183 = vunpack.c.l.b16 %v1087
    %v1184 = vunpack.c.l.b16 %v1088
    %v1185 = vunpack.c.l.b16 %v1089
    %v1186 = vunpack.c.l.b16 %v1090
    %v1187 = vunpack.c.l.b16 %v1091
    %v1188 = vunpack.c.l.b16 %v1092
    %v1189 = vunpack.c.l.b16 %v1093
    %v1190 = vunpack.c.l.b16 %v1094
    %v1191 = vunpack.c.l.b16 %v1095
    %v1192 = vunpack.c.l.b16 %v1096
    %v1193 = vunpack.c.l.b16 %v1097
    %v1194 = vunpack.c.l.b16 %v1098
    %v1195 = vunpack.c.l.b16 %v1099
    %v1196 = vunpack.c.l.b16 %v1100
    %v1197 = vunpack.c.l.b16 %v1101
    %v1198 = vunpack.c.l.b16 %v1102
    %v1199 = vunpack.c.l.b16 %v1103
    %v1200 = vunpack.c.l.b16 %v1104
    %v1201 = vunpack.c.l.b16 %v1105
    %v1202 = vunpack.c.l.b16 %v1106
    %v1203 = vunpack.c.l.b16 %v1107
    %v1204 = vunpack.c.l.b16 %v1108
    %v1205 = vunpack.c.l.b16 %v1109
    %v1206 = vunpack.c.l.b16 %v1110
    %v1207 = vunpack.c.l.b16 %v1111
    %v1208 = vunpack.c.l.b16 %v1112
    %v1209 = vunpack.c.l.b16 %v1113
    %v1210 = vunpack.c.l.b16 %v1114
    %v1211 = vunpack.c.l.b16 %v1115
    %v1212 = vunpack.c.l.b16 %v1116
    %v1213 = vunpack.c.l.b16 %v1117
    %v1214 = vunpack.c.l.b16 %v1118
    %v1215 = vunpack.c.l.b16 %v1119
    %v1216 = vpack.c.b16 %v1169, %v1168
    %v1217 = vpack.c.b16 %v1171, %v1170
    %v1218 = vpack.c.b16 %v1173, %v1172
    %v1219 = vpack.c.b16 %v1175, %v1174
    %v1220 = vpack.c.b16 %v1177, %v1176
    %v1221 = vpack.c.b16 %v1179, %v1178
    %v1222 = vpack.c.b16 %v1181, %v1180
    %v1223 = vpack.c.b16 %v1183, %v1182
    %v1224 = vpack.c.b16 %v1185, %v1184
    %v1225 = vpack.c.b16 %v1187, %v1186
    %v1226 = vpack.c.b16 %v1189, %v1188
    %v1227 = vpack.c.b16 %v1191, %v1190
    %v1228 = vpack.c.b16 %v1193, %v1192
    %v1229 = vpack.c.b16 %v1195, %v1194
    %v1230 = vpack.c.b16 %v1197, %v1196
    %v1231 = vpack.c.b16 %v1199, %v1198
    %v1232 = vpack.c.b16 %v1201, %v1200
    %v1233 = vpack.c.b16 %v1203, %v1202
    %v1234 = vpack.c.b16 %v1205, %v1204
    %v1235 = vpack.c.b16 %v1207, %v1206
    %v1236 = vpack.c.b16 %v1209, %v1208
    %v1237 = vpack.c.b16 %v1211, %v1210
    %v1238 = vpack.c.b16 %v1213, %v1212
    %v1239 = vpack.c.b16 %v1215, %v1214
    %1264 = vmatprep.subr.bf16.mxu0 0
    %1265 = vmatpush1.bf16.msra.mxu0 %v1216
    %1266 = vmatprep.subr.bf16.mxu0 0
    %1267 = vmatpush1.bf16.msra.mxu0 %v1217
    %1268 = vmatprep.subr.bf16.mxu0 0
    %1269 = vmatpush1.bf16.msra.mxu0 %v1218
    %1270 = vmatprep.subr.bf16.mxu0 0
    %1271 = vmatpush1.bf16.msra.mxu0 %v1219
    %1272 = vmatprep.subr.bf16.mxu0 0
    %1273 = vmatpush1.bf16.msra.mxu0 %v1220
    %1274 = vmatprep.subr.bf16.mxu0 0
    %1275 = vmatpush1.bf16.msra.mxu0 %v1221
    %1276 = vmatprep.subr.bf16.mxu0 0
    %1277 = vmatpush1.bf16.msra.mxu0 %v1222
    %1278 = vmatprep.subr.bf16.mxu0 0
    %1279 = vmatpush1.bf16.msra.mxu0 %v1223
    %1280 = vmatprep.subr.bf16.mxu0 0
    %1281 = vmatpush1.bf16.msra.mxu0 %v1224
    %1282 = vmatprep.subr.bf16.mxu0 0
    %1283 = vmatpush1.bf16.msra.mxu0 %v1225
    %1284 = vmatprep.subr.bf16.mxu0 0
    %1285 = vmatpush1.bf16.msra.mxu0 %v1226
    %1286 = vmatprep.subr.bf16.mxu0 0
    %1287 = vmatpush1.bf16.msra.mxu0 %v1227
    %1288 = vmatprep.subr.bf16.mxu0 0
    %1289 = vmatpush1.bf16.msra.mxu0 %v1228
    %1290 = vmatprep.subr.bf16.mxu0 0
    %1291 = vmatpush1.bf16.msra.mxu0 %v1229
    %1292 = vmatprep.subr.bf16.mxu0 0
    %1293 = vmatpush1.bf16.msra.mxu0 %v1230
    %1294 = vmatprep.subr.bf16.mxu0 0
    %1295 = vmatpush1.bf16.msra.mxu0 %v1231
    %1296 = vmatprep.mubr.bf16.mxu0 %v1070
    %1297 = vmatmul.mubr.bf16.gmra.mrb[0].mxu0 %v1069
    %v1298 = vpop.f32.mrb[0].mxu0
    %v1299 = vadd.f32 0.0, %v1298
    %v1300 = vpop.f32.mrb[0].mxu0
    %v1301 = vpop.f32.mrb[0].mxu0
    %v1302 = vpop.f32.mrb[0].mxu0
    %1303 = vdwg.mxu0
    %1304 = vmatprep.subr.bf16.mxu0 0
    %1305 = vmatpush1.bf16.msra.mxu0 %v1232
    %1306 = vmatprep.subr.bf16.mxu0 0
    %1307 = vmatpush1.bf16.msra.mxu0 %v1233
    %1308 = vmatprep.subr.bf16.mxu0 0
    %1309 = vmatpush1.bf16.msra.mxu0 %v1234
    %1310 = vmatprep.subr.bf16.mxu0 0
    %1311 = vmatpush1.bf16.msra.mxu0 %v1235
    %1312 = vmatprep.subr.bf16.mxu0 0
    %1313 = vmatpush1.bf16.msra.mxu0 %v1236
    %1314 = vmatprep.subr.bf16.mxu0 0
    %1315 = vmatpush1.bf16.msra.mxu0 %v1237
    %1316 = vmatprep.subr.bf16.mxu0 0
    %1317 = vmatpush1.bf16.msra.mxu0 %v1238
    %1318 = vmatprep.subr.bf16.mxu0 0
    %1319 = vmatpush1.bf16.msra.mxu0 %v1239
    %1320 = vmatprep.subr.bf16.mxu0 0
    %1321 = vmatpush1.bf16.msra.mxu0 0
    %1322 = vmatprep.subr.bf16.mxu0 0
    %1323 = vmatpush1.bf16.msra.mxu0 0
    %1324 = vmatprep.subr.bf16.mxu0 0
    %1325 = vmatpush1.bf16.msra.mxu0 0
    %1326 = vmatprep.subr.bf16.mxu0 0
    %1327 = vmatpush1.bf16.msra.mxu0 0
    %1328 = vmatprep.subr.bf16.mxu0 0
    %1329 = vmatpush1.bf16.msra.mxu0 0
    %1330 = vmatprep.subr.bf16.mxu0 0
    %1331 = vmatpush1.bf16.msra.mxu0 0
    %1332 = vmatprep.subr.bf16.mxu0 0
    %1333 = vmatpush1.bf16.msra.mxu0 0
    %1334 = vmatprep.subr.bf16.mxu0 0
    %1335 = vmatpush1.bf16.msra.mxu0 0
    %1336 = vmatprep.mubr.bf16.mxu0 0
    %1337 = vmatmul.mubr.bf16.gmra.mrb[0].mxu0 %v1071
    %v1338 = vpop.f32.mrb[0].mxu0
    %v1339 = vadd.f32 %v1299, %v1338
    %v1340 = vpop.f32.mrb[0].mxu0
    %v1341 = vpop.f32.mrb[0].mxu0
    %v1342 = vpop.f32.mrb[0].mxu0
    %1343 = vdwg.mxu0
    %v1344 = vld [vmem:[%s6] sm:$0x1]
    %v1346 = vlaneseq
    %v1347 = vshrl.u32 %v1346, 7
    %v1348 = vsub.s32 0, %v1347
    %v1349 = vrot.slane %v1344, %v1348
    %v1351 = vadd.f32 %v1339, %v1349
    %v1352 = vtanh.pop %v1351
    %vm1353 = vcmask 31744
    %1354 = vst.msk [vmem:[%s7] sm:$0xff] %vm1353, %v1352
    // Predicated region
    $region42: #{actor_forward.1} parent=1 // pred_check
      _
    $region43: #{actor_forward.1} parent=1 // pred_check_branch
      %1356 = sbr.rel (0) target = $region45
    $region44: #{actor_forward.1} parent=1 // pred_region
      _
    $region45: #{actor_forward.1} parent=1 // pred_fallthru
      _
    // Predicated region
    $region46: #{actor_forward.1} parent=1 // pred_check
      _
    $region47: #{actor_forward.1} parent=1 // pred_check_branch
      %1358 = sbr.rel (0) target = $region49
    $region48: #{actor_forward.1} parent=1 // pred_region
      _
    $region49: #{actor_forward.1} parent=1 // pred_fallthru
      _
    %1359 = vsyncpa [#allocation3], 1
    %1360 = vsyncpa [#allocation5], 1

</llo_original>
